<compile_context>
chip_gen: v6e
topology: v6e:2x2x1
jax: 0.10.0
libtpu: 0.0.40
codegen_flags: <defaults>
</compile_context>

<pallas_src>
import jax
import jax.numpy as jnp
from jax.experimental import pallas as pl
from jax.experimental.pallas import tpu as pltpu


def _disc_adv_loss_kernel(w_ref, b_ref, real_ref, fake_ref, interp_ref, out_ref):
    # real_ref/fake_ref block: (1, C, RB, 128) in native dtype;
    # interp_ref: (1, 1, RB, 128); w_ref: (C,) f32 SMEM; b_ref: (1,) f32 SMEM.
    _, C, RB, _ = real_ref.shape
    f32 = jnp.float32
    bias = b_ref[0]

    # Fused 1x1-conv (C -> 1) channel accumulation for real & fake planes.
    # Cast to f32 per block (inputs are streamed in their native dtype).
    disc_r = w_ref[0] * real_ref[0, 0].astype(f32)          # (RB, 128)
    disc_f = w_ref[0] * fake_ref[0, 0].astype(f32)
    for c in range(1, C):
        wc = w_ref[c]
        disc_r = disc_r + wc * real_ref[0, c].astype(f32)
        disc_f = disc_f + wc * fake_ref[0, c].astype(f32)
    disc_r = disc_r + bias                                    # bias once/plane
    disc_f = disc_f + bias

    real_loss = jax.nn.softplus(-disc_r)                                # (RB, 128)
    fake_loss = jax.nn.softplus(disc_f) * interp_ref[0, 0].astype(f32)  # masked
    combined = real_loss + fake_loss

    # Emit a lane-dense (8, 128) partial-sum tile; the wrapper reduces it.
    if RB % 8 == 0:
        part = combined.reshape(RB // 8, 8, 128).sum(axis=0)  # vreg-wise adds
    else:
        # Only reachable for tiny full-extent row blocks (rows < 8-ish).
        rowsum = jnp.broadcast_to(combined.sum(axis=0, keepdims=True), (8, 128))
        sub = jax.lax.broadcasted_iota(jnp.int32, (8, 128), 0)
        part = jnp.where(sub == 0, rowsum, jnp.float32(0.0))
    out_ref[0, 0] = part


def _bilinear_matrix(out_size: int, in_size: int) -> jnp.ndarray:
    """Row-interpolation matrix matching F.interpolate(mode='bilinear',
    align_corners=False): out = R @ in, with R of shape (out_size, in_size)."""
    scale = in_size / out_size
    i = jnp.arange(out_size, dtype=jnp.float32)
    s = (i + 0.5) * scale - 0.5
    s = jnp.maximum(s, 0.0)                      # torch clamps negative src idx
    i0 = jnp.floor(s).astype(jnp.int32)
    i0 = jnp.minimum(i0, in_size - 1)
    i1 = jnp.minimum(i0 + 1, in_size - 1)
    l1 = s - i0.astype(jnp.float32)
    l0 = 1.0 - l1
    R = jnp.zeros((out_size, in_size), jnp.float32)
    rows = jnp.arange(out_size)
    R = R.at[rows, i0].add(l0)
    R = R.at[rows, i1].add(l1)
    return R


def _vmem_budget():
    """(working-set budget, scoped-vmem limit) in bytes, generation-aware."""
    try:
        vmem_bytes = pltpu.get_tpu_info().vmem_capacity_bytes
    except Exception:
        vmem_bytes = 64 * 1024 * 1024            # conservative: fits v7x too
    budget = min(max(vmem_bytes // 3, 12 * 1024 * 1024), 48 * 1024 * 1024)
    vmem_limit = int(min(vmem_bytes * 3 // 4, budget * 2))
    return budget, vmem_limit


def _choose_tiling(hw, num_channels, rf_itemsize, mask_itemsize, budget_bytes):
    """Pick (rows, rb): padded row count (lanes = 128) and row-block size.

    Guarantees rows * 128 >= hw and that rb is either a multiple of 8 that
    divides rows or equals rows (full extent), so the (8, 128) BlockSpec rule
    and the VMEM budget always hold.
    """
    # Per row of 128 lanes: double-buffered real+fake+interp streams plus an
    # allowance for the in-kernel f32 temporaries (disc_r/disc_f/losses).
    per_row = (2 * 128 * (2 * num_channels * rf_itemsize + mask_itemsize)
               + 6 * 128 * 4)
    cap = max(8, (budget_bytes // per_row) // 8 * 8)

    rows = pl.cdiv(hw, 128)
    if rows <= cap:
        return rows, rows                        # single row block (full extent)
    best = 0
    d = 8
    while d <= cap:                              # largest mult-of-8 divisor<=cap
        if rows % d == 0:
            best = d
        d += 8
    if best:
        return rows, best
    rb = cap                                     # no divisor fits: pad rows
    return pl.cdiv(rows, rb) * rb, rb


def discriminator_adversarial_loss(fake, real, mask, w, bias):
    """fake, real: (B, C, H, W); mask: (B, 1, Hm, Wm); w: (C,) 1x1-conv weight;
    bias: (1,) conv bias.  Returns the scalar f32 loss (training branch)."""
    B, C, H, W = fake.shape
    Hm, Wm = mask.shape[-2:]
    HW = H * W
    f32 = jnp.float32

    w32 = w.astype(f32)
    b32 = bias.astype(f32)

    # Analytic R1 gradient penalty for the linear 1x1-conv discriminator.
    gp = f32(H * W) * jnp.sum(w32 * w32)

    # Precompute the bilinear mask resample outside the kernel (tiny matmuls),
    # emitted in the streaming dtype to keep its HBM traffic small.
    stream_dtype = fake.dtype
    rh = _bilinear_matrix(H, Hm)                 # (H, Hm)
    rw = _bilinear_matrix(W, Wm)                 # (W, Wm)
    interp = jnp.einsum('hp,bpq,wq->bhw', rh, mask[:, 0].astype(f32), rw)
    interp = interp.astype(stream_dtype)

    # Lane-dense layout: flatten spatial to (rows, 128), zero-padding the tail.
    budget, vmem_limit = _vmem_budget()
    rows, rb = _choose_tiling(HW, C, jnp.dtype(real.dtype).itemsize,
                              jnp.dtype(stream_dtype).itemsize, budget)
    nc = rows // rb
    # Keep total parallel grid extent >= 2 so both v7x TensorCores get work.
    if B * nc < 2 and rows % 16 == 0:
        rb = rows // 2
        nc = 2

    n_pad = rows * 128 - HW

    def _layout(x, c):
        x = x.reshape(B, c, HW)
        if n_pad:
            x = jnp.pad(x, ((0, 0), (0, 0), (0, n_pad)))
        return x.reshape(B, c, rows, 128)

    real_r = _layout(real, C)                    # native dtype: no f32 HBM copy
    fake_r = _layout(fake, C)
    interp_r = _layout(interp[:, None], 1)

    grid_spec = pltpu.PrefetchScalarGridSpec(
        num_scalar_prefetch=2,                   # w, bias -> SMEM
        grid=(B, nc),
        in_specs=[
            pl.BlockSpec((1, C, rb, 128), lambda b, j, w_s, b_s: (b, 0, j, 0)),
            pl.BlockSpec((1, C, rb, 128), lambda b, j, w_s, b_s: (b, 0, j, 0)),
            pl.BlockSpec((1, 1, rb, 128), lambda b, j, w_s, b_s: (b, 0, j, 0)),
        ],
        out_specs=pl.BlockSpec((1, 1, 8, 128), lambda b, j, w_s, b_s: (b, j, 0, 0)),
    )

    partials = pl.pallas_call(
        _disc_adv_loss_kernel,
        out_shape=jax.ShapeDtypeStruct((B, nc, 8, 128), f32),
        grid_spec=grid_spec,
        compiler_params=pltpu.CompilerParams(
            dimension_semantics=("parallel", "parallel"),
            vmem_limit_bytes=vmem_limit),
    )(w32, b32, real_r, fake_r, interp_r)

    total = partials.sum()
    if n_pad:
        # Padded real pixels are zeros -> each contributes softplus(-bias);
        # padded interp is zero, so the fake term vanishes there.
        total = total - f32(B * n_pad) * jax.nn.softplus(-b32[0])
    return total / f32(B * HW) + f32(0.001) * gp


def _reference_loss(fake, real, mask, w, bias):
    """Plain-JAX reference of the same forward (for self-check)."""
    B, C, H, W = fake.shape
    Hm, Wm = mask.shape[-2:]
    disc = lambda x: jnp.einsum('bchw,c->bhw', x, w)[:, None, :, :] + bias[0]
    disc_real = disc(real)
    disc_fake = disc(fake)
    gp = (H * W) * jnp.sum(w ** 2)               # analytic R1 penalty (linear)
    real_loss = jax.nn.softplus(-disc_real)
    fake_loss = jax.nn.softplus(disc_fake)
    rh = _bilinear_matrix(H, Hm)
    rwt = _bilinear_matrix(W, Wm).T
    interp = jnp.einsum('hp,bopq,qw->bohw', rh, mask, rwt)
    return (real_loss + 0.001 * gp + fake_loss * interp).mean()


if __name__ == "__main__":
    key = jax.random.PRNGKey(0)
    k_fake, k_real, k_mask, k_w, k_b = jax.random.split(key, 5)

    B, C, H, W = 2, 4, 16, 16
    Hm, Wm = 8, 8

    fake = jax.random.normal(k_fake, (B, C, H, W), jnp.float32)
    real = jax.random.normal(k_real, (B, C, H, W), jnp.float32)
    mask = jax.random.uniform(k_mask, (B, 1, Hm, Wm), jnp.float32)

    # Deterministic discriminator parameters (1x1 Conv2d(C, 1)).
    w = 0.1 * jax.random.normal(k_w, (C,), jnp.float32)
    bias = 0.01 * jax.random.normal(k_b, (1,), jnp.float32)

    # f32 streaming path.
    loss = jax.block_until_ready(
        discriminator_adversarial_loss(fake, real, mask, w, bias))
    ref = _reference_loss(fake, real, mask, w, bias)
    assert jnp.allclose(loss, ref, rtol=1e-4, atol=1e-4), (loss, ref)

    # bf16 streaming path (native-dtype HBM streams, f32 math in-kernel).
    loss_bf16 = jax.block_until_ready(
        discriminator_adversarial_loss(fake.astype(jnp.bfloat16),
                                       real.astype(jnp.bfloat16),
                                       mask, w, bias))
    ref_bf16 = _reference_loss(fake.astype(jnp.bfloat16).astype(jnp.float32),
                               real.astype(jnp.bfloat16).astype(jnp.float32),
                               mask, w, bias)
    assert jnp.allclose(loss_bf16, ref_bf16, rtol=2e-2, atol=5e-3), (
        loss_bf16, ref_bf16)

    print("KERNEL_OK")
</pallas_src>

<mosaic_0001>
module attributes {stable_mosaic.version = 11 : i64} {
  func.func @_disc_adv_loss_kernel(%arg0: i32, %arg1: i32, %arg2: memref<4xf32, #tpu.memory_space<smem>>, %arg3: memref<1xf32, #tpu.memory_space<smem>>, %arg4: memref<1x4x2x128xf32, #tpu.memory_space<vmem>>, %arg5: memref<1x4x2x128xf32, #tpu.memory_space<vmem>>, %arg6: memref<1x1x2x128xf32, #tpu.memory_space<vmem>>, %arg7: memref<1x1x8x128xf32, #tpu.memory_space<vmem>>) attributes {dimension_semantics = [#tpu.dimension_semantics<parallel>, #tpu.dimension_semantics<parallel>], iteration_bounds = array<i64: 2, 1>, scalar_prefetch = 2 : i64, scratch_operands = 0 : i64, tpu.core_type = #tpu.core_type<tc>, window_params = [{transform_indices = @transform_0, window_bounds = array<i64: 1, 4, 2, 128>}, {transform_indices = @transform_1, window_bounds = array<i64: 1, 4, 2, 128>}, {transform_indices = @transform_2, window_bounds = array<i64: 1, 1, 2, 128>}, {transform_indices = @transform_3, window_bounds = array<i64: 1, 1, 8, 128>}]} {
    %c0 = arith.constant 0 : index
    %0 = memref.load %arg3[%c0] : memref<1xf32, #tpu.memory_space<smem>>
    %c0_0 = arith.constant 0 : index
    %1 = memref.load %arg2[%c0_0] : memref<4xf32, #tpu.memory_space<smem>>
    %c0_1 = arith.constant 0 : index
    %c0_2 = arith.constant 0 : index
    %c0_3 = arith.constant 0 : index
    %c0_4 = arith.constant 0 : index
    %2 = vector.load %arg4[%c0_1, %c0_2, %c0_3, %c0_4] : memref<1x4x2x128xf32, #tpu.memory_space<vmem>>, vector<1x1x2x128xf32>
    %3 = vector.shape_cast %2 : vector<1x1x2x128xf32> to vector<2x128xf32>
    %4 = vector.broadcast %1 : f32 to vector<2x128xf32>
    %5 = arith.mulf %4, %3 : vector<2x128xf32>
    %c0_5 = arith.constant 0 : index
    %6 = memref.load %arg2[%c0_5] : memref<4xf32, #tpu.memory_space<smem>>
    %c0_6 = arith.constant 0 : index
    %c0_7 = arith.constant 0 : index
    %c0_8 = arith.constant 0 : index
    %c0_9 = arith.constant 0 : index
    %7 = vector.load %arg5[%c0_6, %c0_7, %c0_8, %c0_9] : memref<1x4x2x128xf32, #tpu.memory_space<vmem>>, vector<1x1x2x128xf32>
    %8 = vector.shape_cast %7 : vector<1x1x2x128xf32> to vector<2x128xf32>
    %9 = vector.broadcast %6 : f32 to vector<2x128xf32>
    %10 = arith.mulf %9, %8 : vector<2x128xf32>
    %c1 = arith.constant 1 : index
    %11 = memref.load %arg2[%c1] : memref<4xf32, #tpu.memory_space<smem>>
    %c0_10 = arith.constant 0 : index
    %c1_11 = arith.constant 1 : index
    %c0_12 = arith.constant 0 : index
    %c0_13 = arith.constant 0 : index
    %12 = vector.load %arg4[%c0_10, %c1_11, %c0_12, %c0_13] : memref<1x4x2x128xf32, #tpu.memory_space<vmem>>, vector<1x1x2x128xf32>
    %13 = vector.shape_cast %12 : vector<1x1x2x128xf32> to vector<2x128xf32>
    %14 = vector.broadcast %11 : f32 to vector<2x128xf32>
    %15 = arith.mulf %14, %13 : vector<2x128xf32>
    %16 = arith.addf %5, %15 : vector<2x128xf32>
    %c0_14 = arith.constant 0 : index
    %c1_15 = arith.constant 1 : index
    %c0_16 = arith.constant 0 : index
    %c0_17 = arith.constant 0 : index
    %17 = vector.load %arg5[%c0_14, %c1_15, %c0_16, %c0_17] : memref<1x4x2x128xf32, #tpu.memory_space<vmem>>, vector<1x1x2x128xf32>
    %18 = vector.shape_cast %17 : vector<1x1x2x128xf32> to vector<2x128xf32>
    %19 = vector.broadcast %11 : f32 to vector<2x128xf32>
    %20 = arith.mulf %19, %18 : vector<2x128xf32>
    %21 = arith.addf %10, %20 : vector<2x128xf32>
    %c2 = arith.constant 2 : index
    %22 = memref.load %arg2[%c2] : memref<4xf32, #tpu.memory_space<smem>>
    %c0_18 = arith.constant 0 : index
    %c2_19 = arith.constant 2 : index
    %c0_20 = arith.constant 0 : index
    %c0_21 = arith.constant 0 : index
    %23 = vector.load %arg4[%c0_18, %c2_19, %c0_20, %c0_21] : memref<1x4x2x128xf32, #tpu.memory_space<vmem>>, vector<1x1x2x128xf32>
    %24 = vector.shape_cast %23 : vector<1x1x2x128xf32> to vector<2x128xf32>
    %25 = vector.broadcast %22 : f32 to vector<2x128xf32>
    %26 = arith.mulf %25, %24 : vector<2x128xf32>
    %27 = arith.addf %16, %26 : vector<2x128xf32>
    %c0_22 = arith.constant 0 : index
    %c2_23 = arith.constant 2 : index
    %c0_24 = arith.constant 0 : index
    %c0_25 = arith.constant 0 : index
    %28 = vector.load %arg5[%c0_22, %c2_23, %c0_24, %c0_25] : memref<1x4x2x128xf32, #tpu.memory_space<vmem>>, vector<1x1x2x128xf32>
    %29 = vector.shape_cast %28 : vector<1x1x2x128xf32> to vector<2x128xf32>
    %30 = vector.broadcast %22 : f32 to vector<2x128xf32>
    %31 = arith.mulf %30, %29 : vector<2x128xf32>
    %32 = arith.addf %21, %31 : vector<2x128xf32>
    %c3 = arith.constant 3 : index
    %33 = memref.load %arg2[%c3] : memref<4xf32, #tpu.memory_space<smem>>
    %c0_26 = arith.constant 0 : index
    %c3_27 = arith.constant 3 : index
    %c0_28 = arith.constant 0 : index
    %c0_29 = arith.constant 0 : index
    %34 = vector.load %arg4[%c0_26, %c3_27, %c0_28, %c0_29] : memref<1x4x2x128xf32, #tpu.memory_space<vmem>>, vector<1x1x2x128xf32>
    %35 = vector.shape_cast %34 : vector<1x1x2x128xf32> to vector<2x128xf32>
    %36 = vector.broadcast %33 : f32 to vector<2x128xf32>
    %37 = arith.mulf %36, %35 : vector<2x128xf32>
    %38 = arith.addf %27, %37 : vector<2x128xf32>
    %c0_30 = arith.constant 0 : index
    %c3_31 = arith.constant 3 : index
    %c0_32 = arith.constant 0 : index
    %c0_33 = arith.constant 0 : index
    %39 = vector.load %arg5[%c0_30, %c3_31, %c0_32, %c0_33] : memref<1x4x2x128xf32, #tpu.memory_space<vmem>>, vector<1x1x2x128xf32>
    %40 = vector.shape_cast %39 : vector<1x1x2x128xf32> to vector<2x128xf32>
    %41 = vector.broadcast %33 : f32 to vector<2x128xf32>
    %42 = arith.mulf %41, %40 : vector<2x128xf32>
    %43 = arith.addf %32, %42 : vector<2x128xf32>
    %44 = vector.broadcast %0 : f32 to vector<2x128xf32>
    %45 = arith.addf %38, %44 : vector<2x128xf32>
    %46 = vector.broadcast %0 : f32 to vector<2x128xf32>
    %47 = arith.addf %43, %46 : vector<2x128xf32>
    %cst = arith.constant 0.000000e+00 : f32
    %48 = vector.broadcast %cst : f32 to vector<2x128xf32>
    %49 = arith.subf %48, %45 : vector<2x128xf32>
    %cst_34 = arith.constant 0.000000e+00 : f32
    %50 = vector.broadcast %cst_34 : f32 to vector<2x128xf32>
    %51 = arith.maximumf %49, %50 : vector<2x128xf32>
    %52 = vector.broadcast %cst_34 : f32 to vector<2x128xf32>
    %53 = arith.subf %49, %52 : vector<2x128xf32>
    %54 = arith.cmpf one, %53, %53 : vector<2x128xf32>
    %55 = vector.broadcast %cst_34 : f32 to vector<2x128xf32>
    %56 = arith.addf %49, %55 : vector<2x128xf32>
    %57 = math.absf %53 : vector<2x128xf32>
    %cst_35 = arith.constant 0.000000e+00 : f32
    %58 = vector.broadcast %cst_35 : f32 to vector<2x128xf32>
    %59 = arith.subf %58, %57 : vector<2x128xf32>
    %60 = math.exp %59 : vector<2x128xf32>
    %61 = math.log1p %60 : vector<2x128xf32>
    %62 = arith.addf %51, %61 : vector<2x128xf32>
    %63 = arith.select %54, %56, %62 : vector<2x128xi1>, vector<2x128xf32>
    %cst_36 = arith.constant 0.000000e+00 : f32
    %64 = vector.broadcast %cst_36 : f32 to vector<2x128xf32>
    %65 = arith.maximumf %47, %64 : vector<2x128xf32>
    %66 = vector.broadcast %cst_36 : f32 to vector<2x128xf32>
    %67 = arith.subf %47, %66 : vector<2x128xf32>
    %68 = arith.cmpf one, %67, %67 : vector<2x128xf32>
    %69 = vector.broadcast %cst_36 : f32 to vector<2x128xf32>
    %70 = arith.addf %47, %69 : vector<2x128xf32>
    %71 = math.absf %67 : vector<2x128xf32>
    %cst_37 = arith.constant 0.000000e+00 : f32
    %72 = vector.broadcast %cst_37 : f32 to vector<2x128xf32>
    %73 = arith.subf %72, %71 : vector<2x128xf32>
    %74 = math.exp %73 : vector<2x128xf32>
    %75 = math.log1p %74 : vector<2x128xf32>
    %76 = arith.addf %65, %75 : vector<2x128xf32>
    %77 = arith.select %68, %70, %76 : vector<2x128xi1>, vector<2x128xf32>
    %c0_38 = arith.constant 0 : index
    %c0_39 = arith.constant 0 : index
    %c0_40 = arith.constant 0 : index
    %c0_41 = arith.constant 0 : index
    %78 = vector.load %arg6[%c0_38, %c0_39, %c0_40, %c0_41] : memref<1x1x2x128xf32, #tpu.memory_space<vmem>>, vector<1x1x2x128xf32>
    %79 = vector.shape_cast %78 : vector<1x1x2x128xf32> to vector<2x128xf32>
    %80 = arith.mulf %77, %79 : vector<2x128xf32>
    %81 = arith.addf %63, %80 : vector<2x128xf32>
    %cst_42 = arith.constant dense<0.000000e+00> : vector<128xf32>
    %82 = vector.multi_reduction <add>, %81, %cst_42 [0] : vector<2x128xf32> to vector<128xf32>
    %83 = vector.shape_cast %82 : vector<128xf32> to vector<1x128xf32>
    %84 = vector.shape_cast %83 : vector<1x128xf32> to vector<1x128xf32>
    %85 = vector.broadcast %84 : vector<1x128xf32> to vector<8x128xf32>
    %86 = tpu.iota {dimensions = array<i32: 0>} : vector<8x128xi32>
    %c0_i32 = arith.constant 0 : i32
    %87 = vector.broadcast %c0_i32 : i32 to vector<8x128xi32>
    %88 = arith.cmpi eq, %86, %87 : vector<8x128xi32>
    %cst_43 = arith.constant 0.000000e+00 : f32
    %89 = vector.broadcast %cst_43 : f32 to vector<8x128xf32>
    %90 = arith.select %88, %85, %89 : vector<8x128xi1>, vector<8x128xf32>
    %c0_44 = arith.constant 0 : index
    %c0_45 = arith.constant 0 : index
    %c0_46 = arith.constant 0 : index
    %c0_47 = arith.constant 0 : index
    %91 = vector.load %arg7[%c0_44, %c0_45, %c0_46, %c0_47] : memref<1x1x8x128xf32, #tpu.memory_space<vmem>>, vector<1x1x8x128xf32>
    %92 = vector.shape_cast %91 : vector<1x1x8x128xf32> to vector<8x128xf32>
    %93 = vector.shape_cast %90 : vector<8x128xf32> to vector<1x1x8x128xf32>
    tpu.vector_store %arg7[%c0_44, %c0_45, %c0_46, %c0_47], %93 {strides = array<i32>} : memref<1x1x8x128xf32, #tpu.memory_space<vmem>>, vector<1x1x8x128xf32>,
    return
  }
  func.func @transform_0(%arg0: i32, %arg1: i32, %arg2: memref<4xf32, #tpu.memory_space<smem>>, %arg3: memref<1xf32, #tpu.memory_space<smem>>) -> (i32, i32, i32, i32) {
    %c0_i32 = arith.constant 0 : i32
    %c0_i32_0 = arith.constant 0 : i32
    %c0_i32_1 = arith.constant 0 : i32
    return %arg0, %c0_i32, %arg1, %c0_i32_0 : i32, i32, i32, i32
  }
  func.func @transform_1(%arg0: i32, %arg1: i32, %arg2: memref<4xf32, #tpu.memory_space<smem>>, %arg3: memref<1xf32, #tpu.memory_space<smem>>) -> (i32, i32, i32, i32) {
    %c0_i32 = arith.constant 0 : i32
    %c0_i32_0 = arith.constant 0 : i32
    %c0_i32_1 = arith.constant 0 : i32
    return %arg0, %c0_i32, %arg1, %c0_i32_0 : i32, i32, i32, i32
  }
  func.func @transform_2(%arg0: i32, %arg1: i32, %arg2: memref<4xf32, #tpu.memory_space<smem>>, %arg3: memref<1xf32, #tpu.memory_space<smem>>) -> (i32, i32, i32, i32) {
    %c0_i32 = arith.constant 0 : i32
    %c0_i32_0 = arith.constant 0 : i32
    %c0_i32_1 = arith.constant 0 : i32
    return %arg0, %c0_i32, %arg1, %c0_i32_0 : i32, i32, i32, i32
  }
  func.func @transform_3(%arg0: i32, %arg1: i32, %arg2: memref<4xf32, #tpu.memory_space<smem>>, %arg3: memref<1xf32, #tpu.memory_space<smem>>) -> (i32, i32, i32, i32) {
    %c0_i32 = arith.constant 0 : i32
    %c0_i32_0 = arith.constant 0 : i32
    %c0_i32_1 = arith.constant 0 : i32
    return %arg0, %arg1, %c0_i32, %c0_i32_0 : i32, i32, i32, i32
  }
}

</mosaic_0001>

<llo_original>
// kernel: tpu_custom_call.1
$region0: #{tpu_custom_call.1}
  #allocation0 [shape = 'u32[]', space=smem, size = 0x4, offset = 0x4, fixed_abs, tag = 'smem constant byte address 0x4 - core index']
  #allocation1 [shape = 'u32[144,128]{1,0:T(1,128)}', space=vmem, size = 0x12000, scoped, tag = 'internal scratch']
  #allocation2 [shape = 's32[1]{0}', space=sflag, size = 0x4, scoped, tag = 'scoped memory for tpu_custom_call.1']
  #allocation3 [shape = 'u8[512]{0}', space=smem, size = 0x200, scoped, tag = 'prefetched SMEM operand 0']
  #allocation4 [shape = 'f32[1]{0:T(128)S(6)}', space=smem, size = 0x200, scoped, tag = 'prefetched SMEM operand 1']
  %s0 = inlined_call_operand.vmem [shape: f32[4], index: 0, kind: input, shape index: {}]
  %s1 = inlined_call_operand.<no memory space> [shape: f32[1], index: 1, kind: input, shape index: {}]
  %s2 = inlined_call_operand.hbm [shape: f32[2,4,2,128], index: 2, kind: input, shape index: {}]
  %s3 = inlined_call_operand.hbm [shape: f32[2,4,2,128], index: 3, kind: input, shape index: {}]
  %s4 = inlined_call_operand.vmem [shape: f32[2,1,2,128], index: 4, kind: input, shape index: {}]
  %s5 = inlined_call_operand.hbm [shape: f32[2,1,8,128], index: 5, kind: output, shape index: {}]
  %s6 = sld [smem:[#allocation0]]
  $region53: #{tpu_custom_call.1} parent=0
    _
  %s8 = ssub.s32 1, %s6
  %s9 = scalar_select 0, %s8, %s6
  %s10 = sshll.u32 %s0, 4
  %s11 = int_to_ptr.vmem [resolvable:$true] %s10
  %13 = dma.vmem_to_smem %s11, 16, [#allocation3], [#allocation2]
  %14 = sst [smem:[#allocation4]] %s1
  %15 = dma.done [#allocation2], 16
  %16 = sfence
  $region1: #{tpu_custom_call.1} parent=0
    #allocation5 [shape = 'u8[8192]{0}', space=vmem, size = 0x2000, scoped, tag = 'input window, operand 2']
    #allocation6 [shape = 's32[2]{0}', space=sflag, size = 0x8, scoped, tag = 'scoped memory for tpu_custom_call.1']
    #allocation7 [shape = 's32[2]{0}', space=sflag, size = 0x8, scoped, tag = 'scoped memory for tpu_custom_call.1']
    #allocation8 [shape = 'u8[8192]{0}', space=vmem, size = 0x2000, scoped, tag = 'input window, operand 3']
    #allocation9 [shape = 's32[2]{0}', space=sflag, size = 0x8, scoped, tag = 'scoped memory for tpu_custom_call.1']
    #allocation10 [shape = 'u8[8192]{0}', space=vmem, size = 0x2000, scoped, tag = 'output window, operand 0']
    %17 = vsyncpa [#allocation6], 0
    %s18 = scalar_lea.sflag [#allocation6], 1
    %19 = vsyncpa %s18, 0
    %20 = vsyncpa [#allocation9], 0
    %s21 = scalar_lea.sflag [#allocation9], 1
    %22 = vsyncpa %s21, 0
    %23 = vsyncpa [#allocation7], 0
    %s24 = scalar_lea.sflag [#allocation7], 1
    %25 = vsyncpa %s24, 0
    loop: start=0, step=1, limit=4
    $region2: #{tpu_custom_call.1} parent=1 // loop_pre_header
      _
    $region3: #{tpu_custom_call.1} parent=1 // loop_header
      %s27 = sphi 0, %s31
      %p28 = scmp.ge.s32.totalorder %s27, 4
      %s34 = sphi 0, %s46
      %s35 = sphi 0, %s42
      %s36 = sphi 0, %s34
      %s37 = sphi 0, %s35
      %s38 = sphi 0, %s36
      %s39 = sphi 0, %s37
      %s51 = sphi 0, %s53
      %s54 = sphi 0, %s51
      %s55 = sphi 0, %s54
      %s71 = sphi 0, %s55
      %s79 = sphi 0, %s81
      %s82 = sphi 0, %s79
      %s83 = sphi 0, %s82
      %s99 = sphi 0, %s83
      %s107 = sphi 0, %s109
      %s110 = sphi 0, %s107
      %s111 = sphi 0, %s110
      %s127 = sphi 0, %s111
      %s135 = sphi 0, %s137
      %s138 = sphi 0, %s135
      %s139 = sphi 0, %s138
      %s155 = sphi 0, %s139
    $region4: #{tpu_custom_call.1} parent=1 // loop_header_branch
      %30 = sbr.rel (%p28) target = $region8
    $region5: #{tpu_custom_call.1} parent=1 // loop_body
      %s32 = ssub.s32 %s27, 1
      %s33 = ssub.s32 %s27, 2
      %s40 = sadd.s32 1, %s35
      %p41 = scmp.ge.s32.totalorder %s40, 1
      %s42 = scalar_select %p41, 0, %s40
      %s43 = sadd.s32 1, %s34
      %s44 = scalar_select %p41, %s43, %s34
      %p45 = scmp.ge.s32.totalorder %s44, 2
      %s46 = scalar_select %p45, 0, %s44
      %s47 = ssub.s32 %s34, %s46
      %s48 = ssub.s32 %s35, %s42
      %s49 = sor.u32 %s47, %s48
      %p50 = scmp.eq.s32.totalorder %s49, 0
      %s52 = sadd.s32 %s51, 1
      %s53 = scalar_select %p50, %s51, %s52
      %p56 = pneg %p50
      %p57 = scmp.eq.s32.totalorder %s27, 1
      %p58 = por %p56, %p57
      %p59 = scmp.ne.s32.totalorder %s51, %s54
      %p60 = scmp.eq.s32.totalorder %s27, 0
      %p61 = por %p59, %p60
      %p62 = scmp.ne.s32.totalorder %s51, %s54
      %p63 = scmp.eq.s32.totalorder %s32, 1
      %p64 = por %p62, %p63
      %p65 = scmp.ne.s32.totalorder %s54, %s55
      %p66 = scmp.eq.s32.totalorder %s32, 0
      %p67 = por %p65, %p66
      %p68 = scmp.ne.s32.totalorder %s54, %s55
      %p69 = scmp.eq.s32.totalorder %s33, 1
      %p70 = por %p68, %p69
      %p72 = scmp.ne.s32.totalorder %s55, %s71
      %p73 = scmp.eq.s32.totalorder %s33, 0
      %p74 = por %p72, %p73
      %s75 = ssub.s32 %s34, %s46
      %s76 = ssub.s32 %s35, %s42
      %s77 = sor.u32 %s75, %s76
      %p78 = scmp.eq.s32.totalorder %s77, 0
      %s80 = sadd.s32 %s79, 1
      %s81 = scalar_select %p78, %s79, %s80
      %p84 = pneg %p78
      %p85 = scmp.eq.s32.totalorder %s27, 1
      %p86 = por %p84, %p85
      %p87 = scmp.ne.s32.totalorder %s79, %s82
      %p88 = scmp.eq.s32.totalorder %s27, 0
      %p89 = por %p87, %p88
      %p90 = scmp.ne.s32.totalorder %s79, %s82
      %p91 = scmp.eq.s32.totalorder %s32, 1
      %p92 = por %p90, %p91
      %p93 = scmp.ne.s32.totalorder %s82, %s83
      %p94 = scmp.eq.s32.totalorder %s32, 0
      %p95 = por %p93, %p94
      %p96 = scmp.ne.s32.totalorder %s82, %s83
      %p97 = scmp.eq.s32.totalorder %s33, 1
      %p98 = por %p96, %p97
      %p100 = scmp.ne.s32.totalorder %s83, %s99
      %p101 = scmp.eq.s32.totalorder %s33, 0
      %p102 = por %p100, %p101
      %s103 = ssub.s32 %s34, %s46
      %s104 = ssub.s32 %s35, %s42
      %s105 = sor.u32 %s103, %s104
      %p106 = scmp.eq.s32.totalorder %s105, 0
      %s108 = sadd.s32 %s107, 1
      %s109 = scalar_select %p106, %s107, %s108
      %p112 = pneg %p106
      %p113 = scmp.eq.s32.totalorder %s27, 1
      %p114 = por %p112, %p113
      %p115 = scmp.ne.s32.totalorder %s107, %s110
      %p116 = scmp.eq.s32.totalorder %s27, 0
      %p117 = por %p115, %p116
      %p118 = scmp.ne.s32.totalorder %s107, %s110
      %p119 = scmp.eq.s32.totalorder %s32, 1
      %p120 = por %p118, %p119
      %p121 = scmp.ne.s32.totalorder %s110, %s111
      %p122 = scmp.eq.s32.totalorder %s32, 0
      %p123 = por %p121, %p122
      %p124 = scmp.ne.s32.totalorder %s110, %s111
      %p125 = scmp.eq.s32.totalorder %s33, 1
      %p126 = por %p124, %p125
      %p128 = scmp.ne.s32.totalorder %s111, %s127
      %p129 = scmp.eq.s32.totalorder %s33, 0
      %p130 = por %p128, %p129
      %s131 = ssub.s32 %s34, %s46
      %s132 = ssub.s32 %s35, %s42
      %s133 = sor.u32 %s131, %s132
      %p134 = scmp.eq.s32.totalorder %s133, 0
      %s136 = sadd.s32 %s135, 1
      %s137 = scalar_select %p134, %s135, %s136
      %p140 = pneg %p134
      %p141 = scmp.eq.s32.totalorder %s27, 1
      %p142 = por %p140, %p141
      %p143 = scmp.ne.s32.totalorder %s135, %s138
      %p144 = scmp.eq.s32.totalorder %s27, 0
      %p145 = por %p143, %p144
      %p146 = scmp.ne.s32.totalorder %s135, %s138
      %p147 = scmp.eq.s32.totalorder %s32, 1
      %p148 = por %p146, %p147
      %p149 = scmp.ne.s32.totalorder %s138, %s139
      %p150 = scmp.eq.s32.totalorder %s32, 0
      %p151 = por %p149, %p150
      %p152 = scmp.ne.s32.totalorder %s138, %s139
      %p153 = scmp.eq.s32.totalorder %s33, 1
      %p154 = por %p152, %p153
      %p156 = scmp.ne.s32.totalorder %s139, %s155
      %p157 = scmp.eq.s32.totalorder %s33, 0
      %p158 = por %p156, %p157
      %p159 = scmp.le.s32.totalorder 1, %s27
      %p160 = scmp.lt.s32.totalorder %s27, 3
      %p161 = pnand %p159, %p160
      %p162 = pneg %p161
      // Predicated region
      $region9: #{tpu_custom_call.1} parent=5 // pred_check
        _
      $region10: #{tpu_custom_call.1} parent=5 // pred_check_branch
        %164 = sbr.rel (%p161) target = $region12
      $region11: #{tpu_custom_call.1} parent=5 // pred_region
        %s165 = ssub.s32 %s27, 1
      $region12: #{tpu_custom_call.1} parent=5 // pred_fallthru
        _
      %p166 = scmp.lt.s32.totalorder %s27, 2
      // Predicated region
      $region13: #{tpu_custom_call.1} parent=5 // pred_check
        %p167 = pneg %p166
      $region14: #{tpu_custom_call.1} parent=5 // pred_check_branch
        %169 = sbr.rel (%p167) target = $region16
      $region15: #{tpu_custom_call.1} parent=5 // pred_region
        // Predicated region
        $region17: #{tpu_custom_call.1} parent=15 // pred_check
          %p170 = pneg %p61
        $region18: #{tpu_custom_call.1} parent=15 // pred_check_branch
          %172 = sbr.rel (%p170) target = $region20
        $region19: #{tpu_custom_call.1} parent=15 // pred_region
          %s173 = sand.u32 %s51, 1
          %s174 = scalar_lea.sflag [#allocation6], %s173
          %s175 = sand.u32 %s51, 1
          %s176 = smul.addr %s175, 8
          %s177 = scalar_lea.vmem [#allocation5], %s176
          %s179 = ssub.s32 128, 128
          %180 = vsyncadd %s174, %s179
          %s181 = smul.addr %s34, 4
          %s182 = sadd.s32 %s35, %s181
          %s183 = smul.addr %s182, 32
          %s184 = scalar_lea.hbm %s2, %s183
          %s185 = sshll.u32 %s177, 4
          %s186 = int_to_ptr.vmem [resolvable:$true] %s185
          %191 = dma.hbm_to_vmem [thread:$0]  %s184, 128, %s186, %s174, 32, 32, 2
        $region20: #{tpu_custom_call.1} parent=15 // pred_fallthru
          _
        // Predicated region
        $region21: #{tpu_custom_call.1} parent=15 // pred_check
          %p192 = pneg %p89
        $region22: #{tpu_custom_call.1} parent=15 // pred_check_branch
          %194 = sbr.rel (%p192) target = $region24
        $region23: #{tpu_custom_call.1} parent=15 // pred_region
          %s195 = sand.u32 %s79, 1
          %s196 = scalar_lea.sflag [#allocation9], %s195
          %s197 = sand.u32 %s79, 1
          %s198 = smul.addr %s197, 8
          %s199 = scalar_lea.vmem [#allocation8], %s198
          %s201 = ssub.s32 128, 128
          %202 = vsyncadd %s196, %s201
          %s203 = smul.addr %s34, 4
          %s204 = sadd.s32 %s35, %s203
          %s205 = smul.addr %s204, 32
          %s206 = scalar_lea.hbm %s3, %s205
          %s207 = sshll.u32 %s199, 4
          %s208 = int_to_ptr.vmem [resolvable:$true] %s207
          %213 = dma.hbm_to_vmem [thread:$0]  %s206, 128, %s208, %s196, 32, 32, 2
        $region24: #{tpu_custom_call.1} parent=15 // pred_fallthru
          _
        // Predicated region
        $region25: #{tpu_custom_call.1} parent=15 // pred_check
          %p214 = pneg %p117
        $region26: #{tpu_custom_call.1} parent=15 // pred_check_branch
          %216 = sbr.rel (%p214) target = $region28
        $region27: #{tpu_custom_call.1} parent=15 // pred_region
          %p217 = scmp.lt.s32.totalorder %s34, 1
          %s218 = scalar_select %p217, %s34, 1
          %p219 = scmp.lt.s32.totalorder %s35, 0
          %s220 = scalar_select %p219, %s35, 0
          %s221 = sadd.s32 %s220, %s218
          %s222 = smul.addr %s221, 2
          %s223 = scalar_lea.vmem %s4, %s222
        $region28: #{tpu_custom_call.1} parent=15 // pred_fallthru
          _
      $region16: #{tpu_custom_call.1} parent=5 // pred_fallthru
        _
      %p224 = scmp.le.s32.totalorder 1, %s27
      %p225 = scmp.lt.s32.totalorder %s27, 3
      %p226 = pnand %p224, %p225
      %p227 = pneg %p226
      // Predicated region
      $region29: #{tpu_custom_call.1} parent=5 // pred_check
        _
      $region30: #{tpu_custom_call.1} parent=5 // pred_check_branch
        %229 = sbr.rel (%p226) target = $region32
      $region31: #{tpu_custom_call.1} parent=5 // pred_region
        %s230 = ssub.s32 %s27, 1
        %s231 = sand.u32 %s54, 1
        %s232 = scalar_lea.sflag [#allocation6], %s231
        %s233 = sand.u32 %s54, 1
        %s234 = smul.addr %s233, 8
        %s235 = scalar_lea.vmem [#allocation5], %s234
        // Predicated region
        $region33: #{tpu_custom_call.1} parent=31 // pred_check
          %p236 = pneg %p67
        $region34: #{tpu_custom_call.1} parent=31 // pred_check_branch
          %238 = sbr.rel (%p236) target = $region36
        $region35: #{tpu_custom_call.1} parent=31 // pred_region
          %239 = dma.done %s232, 128
        $region36: #{tpu_custom_call.1} parent=31 // pred_fallthru
          _
        %s240 = sand.u32 %s82, 1
        %s241 = scalar_lea.sflag [#allocation9], %s240
        %s242 = sand.u32 %s82, 1
        %s243 = smul.addr %s242, 8
        %s244 = scalar_lea.vmem [#allocation8], %s243
        // Predicated region
        $region37: #{tpu_custom_call.1} parent=31 // pred_check
          %p245 = pneg %p95
        $region38: #{tpu_custom_call.1} parent=31 // pred_check_branch
          %247 = sbr.rel (%p245) target = $region40
        $region39: #{tpu_custom_call.1} parent=31 // pred_region
          %248 = dma.done %s241, 128
        $region40: #{tpu_custom_call.1} parent=31 // pred_fallthru
          _
        %s249 = sand.u32 %s54, 1
        %s250 = scalar_lea.sflag [#allocation6], %s249
        %s251 = sand.u32 %s54, 1
        %s252 = smul.addr %s251, 8
        %s253 = scalar_lea.vmem [#allocation5], %s252
        %p254 = pneg %p67
        %p255 = pneg %p64
        %s256 = sand.u32 %s82, 1
        %s257 = scalar_lea.sflag [#allocation9], %s256
        %s258 = sand.u32 %s82, 1
        %s259 = smul.addr %s258, 8
        %s260 = scalar_lea.vmem [#allocation8], %s259
        %p261 = pneg %p95
        %p262 = pneg %p92
        %p263 = scmp.lt.s32.totalorder %s36, 1
        %s264 = scalar_select %p263, %s36, 1
        %p265 = scmp.lt.s32.totalorder %s37, 0
        %s266 = scalar_select %p265, %s37, 0
        %s267 = sadd.s32 %s266, %s264
        %s268 = smul.addr %s267, 2
        %s269 = scalar_lea.vmem %s4, %s268
        %p270 = pneg %p123
        %p271 = pneg %p120
        %p272 = pneg %p151
        %p273 = pneg %p148
        %s274 = sand.u32 %s138, 1
        %s275 = scalar_lea.sflag [#allocation7], %s274
        %s276 = sand.u32 %s138, 1
        %s277 = smul.addr %s276, 8
        %s278 = scalar_lea.vmem [#allocation10], %s277
        %p279 = scmp.lt.s32.totalorder %s36, 1
        %s280 = scalar_select %p279, %s36, 1
        %p281 = scmp.lt.s32.totalorder %s37, 0
        %s282 = scalar_select %p281, %s37, 0
        %s283 = sadd.s32 %s282, %s280
        %s284 = smul.addr %s283, 2
        %s285 = scalar_lea.vmem %s4, %s284
        %s286 = sld [smem:[#allocation4]]
        %s287 = sld [smem:[#allocation3]]
        %v288 = vld [vmem:[%s235] sm:$0x3]
        %v289 = vstv %s287
        %v290 = vmul.f32 %v289, %v288
        %v291 = vld [vmem:[%s244] sm:$0x3]
        %v292 = vmul.f32 %v289, %v291
        %s293 = sld [smem:[#allocation3 + $0x1]]
        %s294 = scalar_lea.vmem %s235, 2 [#allocation5]
        %v295 = vld [vmem:[%s294] sm:$0x3]
        %v296 = vstv %s293
        %v297 = vmul.f32 %v296, %v295
        %v298 = vadd.f32 %v290, %v297
        %s299 = scalar_lea.vmem %s244, 2 [#allocation8]
        %v300 = vld [vmem:[%s299] sm:$0x3]
        %v301 = vmul.f32 %v296, %v300
        %v302 = vadd.f32 %v292, %v301
        %s303 = sld [smem:[#allocation3 + $0x2]]
        %s304 = scalar_lea.vmem %s235, 4 [#allocation5]
        %v305 = vld [vmem:[%s304] sm:$0x3]
        %v306 = vstv %s303
        %v307 = vmul.f32 %v306, %v305
        %v308 = vadd.f32 %v298, %v307
        %s309 = scalar_lea.vmem %s244, 4 [#allocation8]
        %v310 = vld [vmem:[%s309] sm:$0x3]
        %v311 = vmul.f32 %v306, %v310
        %v312 = vadd.f32 %v302, %v311
        %s313 = sld [smem:[#allocation3 + $0x3]]
        %s314 = scalar_lea.vmem %s235, 6 [#allocation5]
        %v315 = vld [vmem:[%s314] sm:$0x3]
        %v316 = vstv %s313
        %v317 = vmul.f32 %v316, %v315
        %v318 = vadd.f32 %v308, %v317
        %s319 = scalar_lea.vmem %s244, 6 [#allocation8]
        %v320 = vld [vmem:[%s319] sm:$0x3]
        %v321 = vmul.f32 %v316, %v320
        %v322 = vadd.f32 %v312, %v321
        %v323 = vstv %s286
        %v324 = vadd.f32 %v318, %v323
        %v325 = vadd.f32 %v322, %v323
        %v326 = vsub.f32 0.0, %v324
        %v327 = vmax.f32 %v326, 0.0
        %vm328 = vcmp.ne.f32.partialorder %v326, %v326
        %v329 = vadd.f32 %v326, 0.0
        %v330 = vand.u32 2147483647, %v326
        %v331 = vsub.f32 0.0, %v330
        %v332 = vmul.f32 %v331, 1.442695
        %v333 = vpow.pop %v332
        %v334 = vadd.f32 %v333, 1.0
        %v335 = vlog2.pop %v334
        %v336 = vmul.f32 %v335, 0.6931472
        %v337 = vmul.f32 -0.5, %v333
        %v338 = vadd.f32 %v337, 1.0
        %v339 = vmul.f32 %v338, %v333
        %v340 = vand.u32 2147483647, %v333
        %vm341 = vcmp.lt.f32.partialorder %v340, 0.0004427343
        %v342 = vsel %vm341, %v339, %v336
        %v343 = vadd.f32 %v327, %v342
        %v344 = vsel %vm328, %v329, %v343
        %v345 = vmax.f32 %v325, 0.0
        %vm346 = vcmp.ne.f32.partialorder %v325, %v325
        %v347 = vadd.f32 %v325, 0.0
        %v348 = vand.u32 2147483647, %v325
        %v349 = vsub.f32 0.0, %v348
        %v350 = vmul.f32 %v349, 1.442695
        %v351 = vpow.pop %v350
        %v352 = vadd.f32 %v351, 1.0
        %v353 = vlog2.pop %v352
        %v354 = vmul.f32 %v353, 0.6931472
        %v355 = vmul.f32 -0.5, %v351
        %v356 = vadd.f32 %v355, 1.0
        %v357 = vmul.f32 %v356, %v351
        %v358 = vand.u32 2147483647, %v351
        %vm359 = vcmp.lt.f32.partialorder %v358, 0.0004427343
        %v360 = vsel %vm359, %v357, %v354
        %v361 = vadd.f32 %v345, %v360
        %v362 = vsel %vm346, %v347, %v361
        %v363 = vld [vmem:[%s285] sm:$0x3]
        %v364 = vmul.f32 %v362, %v363
        %v365 = vadd.f32 %v344, %v364
        %vm366 = vcmask 1041408
        %v367 = vsel %vm366, %v365, 0.0
        %v368 = vrot.slane %v367, 4
        %v369 = vadd.f32 %v367, %v368
        %v370 = vrot.slane %v369, 2
        %v371 = vadd.f32 %v369, %v370
        %v372 = vrot.slane %v371, 1
        %v373 = vadd.f32 %v371, %v372
        %v374 = vlaneseq
        %v375 = vshrl.u32 %v374, 7
        %vm376 = vcmp.eq.s32.totalorder %v375, 0
        %v377 = vsel %vm376, %v373, 0.0
        %378 = vst [vmem:[%s278] sm:$0xff] %v377
        %s379 = sand.u32 %s138, 1
        %s380 = scalar_lea.sflag [#allocation7], %s379
        %s381 = sand.u32 %s138, 1
        %s382 = smul.addr %s381, 8
        %s383 = scalar_lea.vmem [#allocation10], %s382
        // Predicated region
        $region41: #{tpu_custom_call.1} parent=31 // pred_check
          %p384 = pneg %p148
        $region42: #{tpu_custom_call.1} parent=31 // pred_check_branch
          %386 = sbr.rel (%p384) target = $region44
        $region43: #{tpu_custom_call.1} parent=31 // pred_region
          %s388 = ssub.s32 128, 128
          %389 = vsyncadd %s380, %s388
          %s390 = sadd.s32 %s37, %s36
          %s391 = smul.addr %s390, 128
          %s392 = scalar_lea.hbm %s5, %s391
          %s394 = sshll.u32 %s383, 4
          %s395 = int_to_ptr.vmem [resolvable:$true] %s394
          %397 = dma.vmem_to_hbm [thread:$0]  %s395, 128, %s392, %s380
        $region44: #{tpu_custom_call.1} parent=31 // pred_fallthru
          _
      $region32: #{tpu_custom_call.1} parent=5 // pred_fallthru
        _
      %p398 = scmp.le.s32.totalorder 2, %s27
      // Predicated region
      $region45: #{tpu_custom_call.1} parent=5 // pred_check
        %p399 = pneg %p398
      $region46: #{tpu_custom_call.1} parent=5 // pred_check_branch
        %401 = sbr.rel (%p399) target = $region48
      $region47: #{tpu_custom_call.1} parent=5 // pred_region
        %s402 = ssub.s32 %s27, 2
        // Predicated region
        $region49: #{tpu_custom_call.1} parent=47 // pred_check
          %p403 = pneg %p154
        $region50: #{tpu_custom_call.1} parent=47 // pred_check_branch
          %405 = sbr.rel (%p403) target = $region52
        $region51: #{tpu_custom_call.1} parent=47 // pred_region
          %s406 = sand.u32 %s139, 1
          %s407 = scalar_lea.sflag [#allocation7], %s406
          %s408 = sand.u32 %s139, 1
          %s409 = smul.addr %s408, 8
          %s410 = scalar_lea.vmem [#allocation10], %s409
          %411 = dma.done %s407, 128
        $region52: #{tpu_custom_call.1} parent=47 // pred_fallthru
          _
      $region48: #{tpu_custom_call.1} parent=5 // pred_fallthru
        _
    $region6: #{tpu_custom_call.1} parent=1 // loop_footer
      %s31 = sadd.s32 1, %s27
    $region7: #{tpu_custom_call.1} parent=1 // loop_footer_branch
      %26 = sbr.rel target = $region3
    $region8: #{tpu_custom_call.1} parent=1 // loop_exit
      _
    %412 = vsyncpa [#allocation6], 1
    %s413 = scalar_lea.sflag [#allocation6], 1
    %414 = vsyncpa %s413, 1
    %415 = vsyncpa [#allocation9], 1
    %s416 = scalar_lea.sflag [#allocation9], 1
    %417 = vsyncpa %s416, 1
    %418 = vsyncpa [#allocation7], 1
    %s419 = scalar_lea.sflag [#allocation7], 1
    %420 = vsyncpa %s419, 1

</llo_original>
